<compile_context>
chip_gen: v5e
topology: v5e:2x2
jax: 0.10.0
libtpu: 0.0.40
codegen_flags: <defaults>
</compile_context>

<pallas_src>
import functools

import jax
import jax.numpy as jnp
from jax.experimental import pallas as pl
from jax.experimental.pallas import tpu as pltpu


# ---------------------------------------------------------------------------
# Kernel
# ---------------------------------------------------------------------------
def _class_linear_kernel(x_ref, w_ref, b_ref, o_ref):
    # x_ref: (TN, C*F_in)   -- streamed over N
    # w_ref: (C*F_in, C*F_out) -- VMEM-resident block-diagonal weight
    # b_ref: (1, C*F_out) f32  -- VMEM-resident bias
    # o_ref: (TN, C*F_out)
    x = x_ref[...]
    if x.dtype != w_ref.dtype:
        # In-kernel cast: VPU work hidden under the x DMA (no extra HBM pass).
        x = x.astype(w_ref.dtype)
    acc = jnp.dot(x, w_ref[...], preferred_element_type=jnp.float32)
    o_ref[...] = (acc + b_ref[...]).astype(o_ref.dtype)


# ---------------------------------------------------------------------------
# Parameter packing (one-time, off the hot path)
# ---------------------------------------------------------------------------
def pack_class_linear_params(weights, biases, compute_dtype=None):
    """Pack per-class Linear params into the kernel layout.

    Args:
      weights: [C, F_out, F_in]  per-class weight (torch convention).
      biases:  [C, F_out]        per-class bias.
      compute_dtype: optional matmul operand dtype (e.g. jnp.bfloat16).

    Returns:
      w_bd:   [C*F_in, C*F_out] block-diagonal weight (off-diag exact zeros).
      b_flat: [1, C*F_out] float32 bias (added in f32 before the output cast).
    """
    c, f_out, f_in = weights.shape
    w_bd = jnp.zeros((c * f_in, c * f_out), dtype=jnp.float32)
    for k in range(c):
        w_bd = w_bd.at[k * f_in:(k + 1) * f_in,
                       k * f_out:(k + 1) * f_out].set(
                           weights[k].T.astype(jnp.float32))
    if compute_dtype is not None:
        w_bd = w_bd.astype(compute_dtype)
    b_flat = biases.reshape(1, c * f_out).astype(jnp.float32)
    return w_bd, b_flat


# ---------------------------------------------------------------------------
# Generation-aware tiling helpers
# ---------------------------------------------------------------------------
def _round_up(v, m):
    return ((v + m - 1) // m) * m


def _tpu_generation():
    """Best-effort TPU generation (7/6/5); 0 if unknown."""
    try:
        kind = jax.devices()[0].device_kind.lower()
    except Exception:
        return 0
    for g in (7, 6, 5):
        if f"v{g}" in kind:
            return g
    return 0


def _default_block_rows(gen):
    # v7x: 3.2 TB/s HBM makes the ~0.35us/step overhead large at 2048 -> 8192.
    # v6e: 4096 halves step overhead and fits the 32 MiB scoped default.
    # v5e: scoped-VMEM default is 16 MiB; 2048 already keeps overhead ~12%.
    if gen >= 7:
        return 8192
    if gen == 6:
        return 4096
    return 2048


# ---------------------------------------------------------------------------
# Forward pass
# ---------------------------------------------------------------------------
@functools.partial(jax.jit, static_argnames=("num_classes", "block_rows",
                                             "min_grid_steps"))
def _class_linear_impl(x, w_bd, b_flat, *, num_classes, block_rows,
                       min_grid_steps):
    n, c, f_in = x.shape
    assert c == num_classes
    k_in, k_out = w_bd.shape
    assert k_in == c * f_in
    f_out = k_out // c

    # Free row-major reshape; NO dtype cast here (cast happens in-kernel).
    x2d = x.reshape(n, k_in)
    out_dtype = w_bd.dtype

    # --- N-tile selection ----------------------------------------------
    if n <= block_rows:
        tn = n                      # full-dim block is always legal
    else:
        tn = block_rows             # multiple of 8 by construction
    # Keep both v7x TensorCores busy: ensure >= min_grid_steps steps when the
    # problem is large enough that splitting doesn't fragment into tiny tiles.
    if min_grid_steps > 1 and n >= min_grid_steps * 512:
        tn = min(tn, _round_up(pl.cdiv(n, min_grid_steps), 8))
    grid = (pl.cdiv(n, tn),)

    # --- VMEM budget with PADDED lane widths ----------------------------
    x_lanes = _round_up(k_in, 128)          # 160 -> 256
    o_lanes = _round_up(k_out, 128)         # 120 -> 128
    x_bytes = jnp.dtype(x2d.dtype).itemsize
    o_bytes = jnp.dtype(out_dtype).itemsize
    w_bytes = jnp.dtype(w_bd.dtype).itemsize
    stream_bytes = 2 * tn * (x_lanes * x_bytes + o_lanes * o_bytes)   # dbl-buf
    resident_bytes = 2 * (_round_up(k_in, 8) * o_lanes * w_bytes
                          + 8 * o_lanes * 4)                           # w + b
    vmem_limit = stream_bytes + resident_bytes + (8 << 20)             # headroom
    vmem_limit = int(min(max(vmem_limit, 24 << 20), 64 << 20))

    # --- Advisory cost estimate so XLA overlaps neighbours --------------
    cost = pl.CostEstimate(
        flops=2 * n * k_in * k_out,
        transcendentals=0,
        bytes_accessed=(n * k_in * x_bytes + n * k_out * o_bytes
                        + k_in * k_out * w_bytes + k_out * 4),
    )

    out2d = pl.pallas_call(
        _class_linear_kernel,
        out_shape=jax.ShapeDtypeStruct((n, k_out), out_dtype),
        grid=grid,
        in_specs=[
            pl.BlockSpec((tn, k_in), lambda i: (i, 0)),      # streams over N
            pl.BlockSpec((k_in, k_out), lambda i: (0, 0)),   # resident weight
            pl.BlockSpec((1, k_out), lambda i: (0, 0)),      # resident bias
        ],
        out_specs=pl.BlockSpec((tn, k_out), lambda i: (i, 0)),
        compiler_params=pltpu.CompilerParams(
            dimension_semantics=("parallel",),
            vmem_limit_bytes=vmem_limit),
        cost_estimate=cost,
    )(x2d, w_bd, b_flat)

    # Free row-major reshape back to the PyTorch layout.
    return out2d.reshape(n, c, f_out)


def class_linear(x, w_bd, b_flat, *, num_classes, block_rows=None):
    """ClassLinear forward.

    Args:
      x:      [N, C, F_in] input (any float dtype; cast to w_bd.dtype in-kernel).
      w_bd:   [C*F_in, C*F_out] packed block-diagonal weight.
      b_flat: [1, C*F_out] packed f32 bias.
      num_classes: C.
      block_rows:  optional N-tile override (else generation-aware default).

    Returns:
      [N, C, F_out] in w_bd.dtype.
    """
    gen = _tpu_generation()
    if block_rows is None:
        block_rows = _default_block_rows(gen)
    min_grid_steps = 8 if gen >= 7 else 1   # v7x has 2 TensorCores per chip
    return _class_linear_impl(x, w_bd, b_flat, num_classes=num_classes,
                              block_rows=block_rows,
                              min_grid_steps=min_grid_steps)


def init_class_linear_params(key, in_features, out_features, num_classes):
    """Mimics torch.nn.Linear default init (uniform +-1/sqrt(in_features))."""
    kw, kb = jax.random.split(key)
    bound = 1.0 / (in_features ** 0.5)
    weights = jax.random.uniform(
        kw, (num_classes, out_features, in_features),
        minval=-bound, maxval=bound, dtype=jnp.float32)
    biases = jax.random.uniform(
        kb, (num_classes, out_features),
        minval=-bound, maxval=bound, dtype=jnp.float32)
    return weights, biases


# ---------------------------------------------------------------------------
# Self-test
# ---------------------------------------------------------------------------
if __name__ == "__main__":
    C, F_IN, F_OUT = 5, 32, 24

    key = jax.random.PRNGKey(0)
    kx, kx2, kp = jax.random.split(key, 3)
    weights, biases = init_class_linear_params(kp, F_IN, F_OUT, C)

    # --- small case: N=16 (single grid step) ---------------------------
    N = 16
    x = jax.random.normal(kx, (N, C, F_IN), dtype=jnp.float32)
    ref = jnp.einsum("ncf,cgf->ncg", x, weights) + biases[None, :, :]

    # f32 path
    w_bd, b_flat = pack_class_linear_params(weights, biases)
    out = jax.block_until_ready(class_linear(x, w_bd, b_flat, num_classes=C))
    assert out.shape == (N, C, F_OUT), out.shape
    assert jnp.allclose(out, ref, atol=1e-4, rtol=1e-4), "f32 mismatch"

    # bf16 streaming path (x stays f32 at the boundary; cast happens in-kernel,
    # accumulation in f32, bf16 output).
    w_bd16, b_flat16 = pack_class_linear_params(weights, biases,
                                                compute_dtype=jnp.bfloat16)
    out16 = jax.block_until_ready(
        class_linear(x, w_bd16, b_flat16, num_classes=C))
    assert out16.shape == (N, C, F_OUT), out16.shape
    assert out16.dtype == jnp.bfloat16
    assert jnp.allclose(out16.astype(jnp.float32), ref, atol=5e-2, rtol=5e-2), \
        "bf16 mismatch"

    # --- larger case: N=4100 (exercises multi-step / ragged grid) ------
    N2 = 4100
    x2 = jax.random.normal(kx2, (N2, C, F_IN), dtype=jnp.float32)
    ref2 = jnp.einsum("ncf,cgf->ncg", x2, weights) + biases[None, :, :]
    out2 = jax.block_until_ready(class_linear(x2, w_bd, b_flat, num_classes=C))
    assert out2.shape == (N2, C, F_OUT), out2.shape
    assert jnp.allclose(out2, ref2, atol=1e-4, rtol=1e-4), "tiled f32 mismatch"

    print("KERNEL_OK")
</pallas_src>

<mosaic_0001>
module attributes {stable_mosaic.version = 11 : i64} {
  func.func @_class_linear_kernel(%arg0: i32, %arg1: memref<16x160xf32, #tpu.memory_space<vmem>>, %arg2: memref<160x120xf32, #tpu.memory_space<vmem>>, %arg3: memref<1x120xf32, #tpu.memory_space<vmem>>, %arg4: memref<16x120xf32, #tpu.memory_space<vmem>>) attributes {dimension_semantics = [#tpu.dimension_semantics<parallel>], iteration_bounds = array<i64: 1>, scalar_prefetch = 0 : i64, scratch_operands = 0 : i64, tpu.core_type = #tpu.core_type<tc>, window_params = [{transform_indices = @transform_0, window_bounds = array<i64: 16, 160>}, {pipeline_mode = #tpu.pipeline_mode<synchronous>, transform_indices = @transform_1, window_bounds = array<i64: 160, 120>}, {pipeline_mode = #tpu.pipeline_mode<synchronous>, transform_indices = @transform_2, window_bounds = array<i64: 1, 120>}, {transform_indices = @transform_3, window_bounds = array<i64: 16, 120>}]} {
    %c0 = arith.constant 0 : index
    %c0_0 = arith.constant 0 : index
    %0 = vector.load %arg1[%c0, %c0_0] : memref<16x160xf32, #tpu.memory_space<vmem>>, vector<16x160xf32>
    %c0_1 = arith.constant 0 : index
    %c0_2 = arith.constant 0 : index
    %1 = vector.load %arg2[%c0_1, %c0_2] : memref<160x120xf32, #tpu.memory_space<vmem>>, vector<160x120xf32>
    %cst = arith.constant dense<0.000000e+00> : vector<16x120xf32>
    %2 = tpu.matmul %0, %1, %cst {dimension_numbers = #tpu.dot_dimension_numbers<[1], [0], [0], [1], [0, 0, 1, 1], [], []>} : vector<16x160xf32>, vector<160x120xf32>, vector<16x120xf32> -> vector<16x120xf32>
    %c0_3 = arith.constant 0 : index
    %c0_4 = arith.constant 0 : index
    %3 = vector.load %arg3[%c0_3, %c0_4] : memref<1x120xf32, #tpu.memory_space<vmem>>, vector<1x120xf32>
    %4 = vector.broadcast %3 : vector<1x120xf32> to vector<16x120xf32>
    %5 = arith.addf %2, %4 : vector<16x120xf32>
    %c0_5 = arith.constant 0 : index
    %c0_6 = arith.constant 0 : index
    %6 = vector.load %arg4[%c0_5, %c0_6] : memref<16x120xf32, #tpu.memory_space<vmem>>, vector<16x120xf32>
    tpu.vector_store %arg4[%c0_5, %c0_6], %5 {strides = array<i32>} : memref<16x120xf32, #tpu.memory_space<vmem>>, vector<16x120xf32>,
    return
  }
  func.func @transform_0(%arg0: i32) -> (i32, i32) {
    %c0_i32 = arith.constant 0 : i32
    %c0_i32_0 = arith.constant 0 : i32
    return %arg0, %c0_i32 : i32, i32
  }
  func.func @transform_1(%arg0: i32) -> (i32, i32) {
    %c0_i32 = arith.constant 0 : i32
    %c0_i32_0 = arith.constant 0 : i32
    %c0_i32_1 = arith.constant 0 : i32
    return %c0_i32, %c0_i32_0 : i32, i32
  }
  func.func @transform_2(%arg0: i32) -> (i32, i32) {
    %c0_i32 = arith.constant 0 : i32
    %c0_i32_0 = arith.constant 0 : i32
    %c0_i32_1 = arith.constant 0 : i32
    return %c0_i32, %c0_i32_0 : i32, i32
  }
  func.func @transform_3(%arg0: i32) -> (i32, i32) {
    %c0_i32 = arith.constant 0 : i32
    %c0_i32_0 = arith.constant 0 : i32
    return %arg0, %c0_i32 : i32, i32
  }
}

</mosaic_0001>

<llo_original>
// kernel: _class_linear_impl.1
$region0: #{_class_linear_impl.1}
  #allocation0 [shape = 'u32[]', space=smem, size = 0x4, offset = 0x4, fixed_abs, tag = 'smem constant byte address 0x4 - core index']
  #allocation1 [shape = 'u32[72,128]{1,0:T(1,128)}', space=vmem, size = 0x9000, scoped, tag = 'internal scratch']
  %s0 = inlined_call_operand.vmem [shape: f32[16,160], index: 0, kind: input, shape index: {}]
  %s1 = inlined_call_operand.vmem [shape: f32[160,120], index: 1, kind: input, shape index: {}]
  %s2 = inlined_call_operand.vmem [shape: f32[1,120], index: 2, kind: input, shape index: {}]
  %s3 = inlined_call_operand.vmem [shape: f32[16,120], index: 3, kind: output, shape index: {}]
  %s4 = sld [smem:[#allocation0]]
  $region22: #{_class_linear_impl.1} parent=0
    _
  %s6 = ssub.s32 1, %s4
  %s7 = scalar_select 0, %s6, %s4
  // Predicated region
  $region2: #{_class_linear_impl.1} parent=0 // pred_check
    _
  $region3: #{_class_linear_impl.1} parent=0 // pred_check_branch
    %9 = sbr.rel (0) target = $region5
  $region4: #{_class_linear_impl.1} parent=0 // pred_region
    _
  $region5: #{_class_linear_impl.1} parent=0 // pred_fallthru
    _
  // Predicated region
  $region6: #{_class_linear_impl.1} parent=0 // pred_check
    _
  $region7: #{_class_linear_impl.1} parent=0 // pred_check_branch
    %11 = sbr.rel (0) target = $region9
  $region8: #{_class_linear_impl.1} parent=0 // pred_region
    _
  $region9: #{_class_linear_impl.1} parent=0 // pred_fallthru
    _
  // Predicated region
  $region10: #{_class_linear_impl.1} parent=0 // pred_check
    _
  $region11: #{_class_linear_impl.1} parent=0 // pred_check_branch
    %13 = sbr.rel (0) target = $region13
  $region12: #{_class_linear_impl.1} parent=0 // pred_region
    _
  $region13: #{_class_linear_impl.1} parent=0 // pred_fallthru
    _
  %v14 = vld [vmem:[%s0] sm:$0xff]
  %v15 = vld [vmem:[%s0 + $0x8] sm:$0xff]
  %v16 = vld [vmem:[%s0 + $0x10] sm:$0xff]
  %v17 = vld [vmem:[%s0 + $0x18] sm:$0xff]
  %v18 = vld [vmem:[%s1] sm:$0xff]
  %v19 = vld [vmem:[%s1 + $0x8] sm:$0xff]
  %v20 = vld [vmem:[%s1 + $0x10] sm:$0xff]
  %v21 = vld [vmem:[%s1 + $0x18] sm:$0xff]
  %v22 = vld [vmem:[%s1 + $0x20] sm:$0xff]
  %v23 = vld [vmem:[%s1 + $0x28] sm:$0xff]
  %v24 = vld [vmem:[%s1 + $0x30] sm:$0xff]
  %v25 = vld [vmem:[%s1 + $0x38] sm:$0xff]
  %v26 = vld [vmem:[%s1 + $0x40] sm:$0xff]
  %v27 = vld [vmem:[%s1 + $0x48] sm:$0xff]
  %v28 = vld [vmem:[%s1 + $0x50] sm:$0xff]
  %v29 = vld [vmem:[%s1 + $0x58] sm:$0xff]
  %v30 = vld [vmem:[%s1 + $0x60] sm:$0xff]
  %v31 = vld [vmem:[%s1 + $0x68] sm:$0xff]
  %v32 = vld [vmem:[%s1 + $0x70] sm:$0xff]
  %v33 = vld [vmem:[%s1 + $0x78] sm:$0xff]
  %v34 = vld [vmem:[%s1 + $0x80] sm:$0xff]
  %v35 = vld [vmem:[%s1 + $0x88] sm:$0xff]
  %v36 = vld [vmem:[%s1 + $0x90] sm:$0xff]
  %v37 = vld [vmem:[%s1 + $0x98] sm:$0xff]
  %v38 = vld [vmem:[%s2] sm:$0x1]
  %v40 = vperm.slane %v38, 0
  %vm42 = vcmask 261120
  %v44 = vsel %vm42, %v15, 0
  %v47 = vsel %vm42, %v17, 0
  %49 = vmatpush.msra.mxu0 %v33
  %50 = vmatpush.msra.mxu0 %v32
  %51 = vmatpush.msra.mxu0 %v31
  %52 = vmatpush.msra.mxu0 %v30
  %53 = vmatpush.msra.mxu0 %v29
  %54 = vmatpush.msra.mxu0 %v28
  %55 = vmatpush.msra.mxu0 %v27
  %56 = vmatpush.msra.mxu0 %v26
  %57 = vmatpush.msra.mxu0 %v25
  %58 = vmatpush.msra.mxu0 %v24
  %59 = vmatpush.msra.mxu0 %v23
  %60 = vmatpush.msra.mxu0 %v22
  %61 = vmatpush.msra.mxu0 %v21
  %62 = vmatpush.msra.mxu0 %v20
  %63 = vmatpush.msra.mxu0 %v19
  %64 = vmatpush.msra.mxu0 %v18
  %65 = vmatmul.f32.gmra.mxu0 %v14
  %v66 = vpop.f32.mrf.mxu0
  %v67 = vadd.f32 %v40, %v66
  %68 = vmatmul.f32.gmra.mxu0 %v16
  %v69 = vpop.f32.mrf.mxu0
  %v70 = vadd.f32 %v40, %v69
  %71 = vdwg.mxu0
  %72 = vmatpush.msra.mxu0 0.0
  %73 = vmatpush.msra.mxu0 0.0
  %74 = vmatpush.msra.mxu0 0.0
  %75 = vmatpush.msra.mxu0 0.0
  %76 = vmatpush.msra.mxu0 0.0
  %77 = vmatpush.msra.mxu0 0.0
  %78 = vmatpush.msra.mxu0 0.0
  %79 = vmatpush.msra.mxu0 0.0
  %80 = vmatpush.msra.mxu0 0.0
  %81 = vmatpush.msra.mxu0 0.0
  %82 = vmatpush.msra.mxu0 0.0
  %83 = vmatpush.msra.mxu0 0.0
  %84 = vmatpush.msra.mxu0 %v37
  %85 = vmatpush.msra.mxu0 %v36
  %86 = vmatpush.msra.mxu0 %v35
  %87 = vmatpush.msra.mxu0 %v34
  %88 = vmatmul.f32.gmra.mxu0 %v44
  %v89 = vpop.f32.mrf.mxu0
  %v90 = vadd.f32 %v67, %v89
  %91 = vmatmul.f32.gmra.mxu0 %v47
  %v92 = vpop.f32.mrf.mxu0
  %v93 = vadd.f32 %v70, %v92
  %94 = vdwg.mxu0
  %vm95 = vcmask 982016
  %96 = vst.msk [vmem:[%s3] sm:$0xff] %vm95, %v90
  %97 = vst.msk [vmem:[%s3 + $0x8] sm:$0xff] %vm95, %v93
  // Predicated region
  $region14: #{_class_linear_impl.1} parent=0 // pred_check
    _
  $region15: #{_class_linear_impl.1} parent=0 // pred_check_branch
    %99 = sbr.rel (0) target = $region17
  $region16: #{_class_linear_impl.1} parent=0 // pred_region
    _
  $region17: #{_class_linear_impl.1} parent=0 // pred_fallthru
    _
  // Predicated region
  $region18: #{_class_linear_impl.1} parent=0 // pred_check
    _
  $region19: #{_class_linear_impl.1} parent=0 // pred_check_branch
    %101 = sbr.rel (0) target = $region21
  $region20: #{_class_linear_impl.1} parent=0 // pred_region
    _
  $region21: #{_class_linear_impl.1} parent=0 // pred_fallthru
    _

</llo_original>
